<compile_context>
chip_gen: v7x
topology: tpu7x:2x2x1
jax: 0.10.0
libtpu: 0.0.40
codegen_flags: <defaults>
</compile_context>

<pallas_src>
import jax
import jax.numpy as jnp
from jax.experimental import pallas as pl
from jax.experimental.pallas import tpu as pltpu


def full3net_kernel(x_ref, w1_ref, b1_ref, w2_ref, b2_ref, w3_ref, b3_ref, o_ref):
    # x_ref: [2, TN]   w1_ref: [H, 2]   b1_ref: [H, 1]
    # w2_ref: [H, H]   b2_ref: [H, 1]   w3_ref: [H, 1]   b3_ref: [1, 1]
    x = x_ref[...]
    w1 = w1_ref[...]

    # Layer 1: contraction K=2 -> two broadcast FMAs on the VPU (skip the MXU).
    pre1 = (w1[:, 0:1] * x[0:1, :]
            + w1[:, 1:2] * x[1:2, :]
            + b1_ref[...])                                   # [H, TN]
    h1 = jnp.tanh(pre1)

    # Layer 2: [H, H] x [H, TN] on the MXU, f32 accumulation.
    pre2 = jnp.dot(w2_ref[...], h1,
                   preferred_element_type=jnp.float32) + b2_ref[...]
    h2 = jnp.tanh(pre2)                                      # [H, TN]

    # Layer 3: output width 1 -> elementwise mul + sublane (XLU) reduction.
    z = jnp.sum(w3_ref[...] * h2, axis=0, keepdims=True) + b3_ref[...]   # [1, TN]

    # sigmoid(z) == 0.5 * tanh(0.5 * z) + 0.5  (single EUP transcendental).
    o_ref[...] = 0.5 * jnp.tanh(0.5 * z) + 0.5


def full3net_forward(x, w1, b1, w2, b2, w3, b3, *, tile_n=512):
    """Forward pass of Full3Net.

    Parameters are in PyTorch nn.Linear layout:
      x:  [N, 2]
      w1: [H, 2],  b1: [H]
      w2: [H, H],  b2: [H]
      w3: [1, H],  b3: [1]
    Returns [N, 1] float32.
    """
    N = x.shape[0]
    H = w1.shape[0]

    # Pad the batch up to a multiple of tile_n (lane-dim multiple of 128).
    n_pad = pl.cdiv(N, tile_n) * tile_n

    # Feature-major layout: batch on the lane axis.
    x_t = jnp.pad(x.astype(jnp.float32).T, ((0, 0), (0, n_pad - N)))     # [2, n_pad]
    b1_c = b1.astype(jnp.float32).reshape(H, 1)
    b2_c = b2.astype(jnp.float32).reshape(H, 1)
    w3_c = w3.astype(jnp.float32).reshape(1, H).T                        # [H, 1]
    b3_c = b3.astype(jnp.float32).reshape(1, 1)

    grid = (n_pad // tile_n,)

    cost = pl.CostEstimate(
        flops=int(n_pad) * (2 * 2 * H + 2 * H * H + 2 * H),
        transcendentals=int(n_pad) * (2 * H + 1),
        bytes_accessed=int(n_pad) * (2 + 1) * 4 + 4 * (H * 2 + H + H * H + H + H + 1),
    )

    out = pl.pallas_call(
        full3net_kernel,
        out_shape=jax.ShapeDtypeStruct((1, n_pad), jnp.float32),
        grid=grid,
        in_specs=[
            pl.BlockSpec((2, tile_n), lambda i: (0, i)),      # x tile (pipelined)
            pl.BlockSpec((H, 2), lambda i: (0, 0)),           # w1 (resident)
            pl.BlockSpec((H, 1), lambda i: (0, 0)),           # b1
            pl.BlockSpec((H, H), lambda i: (0, 0)),           # w2
            pl.BlockSpec((H, 1), lambda i: (0, 0)),           # b2
            pl.BlockSpec((H, 1), lambda i: (0, 0)),           # w3
            pl.BlockSpec((1, 1), lambda i: (0, 0)),           # b3
        ],
        out_specs=pl.BlockSpec((1, tile_n), lambda i: (0, i)),
        compiler_params=pltpu.CompilerParams(
            dimension_semantics=("parallel",),
        ),
        cost_estimate=cost,
    )(x_t, w1.astype(jnp.float32), b1_c, w2.astype(jnp.float32), b2_c, w3_c, b3_c)

    return out[:, :N].T   # [N, 1]


def reference_forward(x, w1, b1, w2, b2, w3, b3):
    h1 = jnp.tanh(x @ w1.T + b1)
    h2 = jnp.tanh(h1 @ w2.T + b2)
    return jax.nn.sigmoid(h2 @ w3.T + b3)


if __name__ == "__main__":
    hid = 32
    N = 200          # not a multiple of the tile -> exercises padding
    tile_n = 128     # two grid steps -> exercises pipelining over the batch grid

    key = jax.random.PRNGKey(0)
    kx, k1, k2, k3, k4, k5, k6 = jax.random.split(key, 7)

    x = jax.random.normal(kx, (N, 2), dtype=jnp.float32)

    # Deterministic PyTorch-nn.Linear-like init (weight [out, in], bias [out]).
    def init_linear(kw, kb, fan_in, fan_out):
        bound = 1.0 / jnp.sqrt(jnp.float32(fan_in))
        w = jax.random.uniform(kw, (fan_out, fan_in), jnp.float32, -bound, bound)
        b = jax.random.uniform(kb, (fan_out,), jnp.float32, -bound, bound)
        return w, b

    w1, b1 = init_linear(k1, k2, 2, hid)
    w2, b2 = init_linear(k3, k4, hid, hid)
    w3, b3 = init_linear(k5, k6, hid, 1)

    out = full3net_forward(x, w1, b1, w2, b2, w3, b3, tile_n=tile_n)
    out = jax.block_until_ready(out)

    ref = reference_forward(x, w1, b1, w2, b2, w3, b3)
    assert out.shape == (N, 1), out.shape
    assert jnp.allclose(out, ref, atol=1e-5, rtol=1e-5), (out, ref)

    print("KERNEL_OK")
</pallas_src>

<mosaic_0001>
module attributes {stable_mosaic.version = 11 : i64} {
  func.func @full3net_kernel(%arg0: i32, %arg1: memref<2x128xf32, #tpu.memory_space<vmem>>, %arg2: memref<32x2xf32, #tpu.memory_space<vmem>>, %arg3: memref<32x1xf32, #tpu.memory_space<vmem>>, %arg4: memref<32x32xf32, #tpu.memory_space<vmem>>, %arg5: memref<32x1xf32, #tpu.memory_space<vmem>>, %arg6: memref<32x1xf32, #tpu.memory_space<vmem>>, %arg7: memref<1x1xf32, #tpu.memory_space<vmem>>, %arg8: memref<1x128xf32, #tpu.memory_space<vmem>>) attributes {dimension_semantics = [#tpu.dimension_semantics<parallel>], iteration_bounds = array<i64: 2>, scalar_prefetch = 0 : i64, scratch_operands = 0 : i64, tpu.core_type = #tpu.core_type<tc>, window_params = [{transform_indices = @transform_0, window_bounds = array<i64: 2, 128>}, {pipeline_mode = #tpu.pipeline_mode<synchronous>, transform_indices = @transform_1, window_bounds = array<i64: 32, 2>}, {pipeline_mode = #tpu.pipeline_mode<synchronous>, transform_indices = @transform_2, window_bounds = array<i64: 32, 1>}, {pipeline_mode = #tpu.pipeline_mode<synchronous>, transform_indices = @transform_3, window_bounds = array<i64: 32, 32>}, {pipeline_mode = #tpu.pipeline_mode<synchronous>, transform_indices = @transform_4, window_bounds = array<i64: 32, 1>}, {pipeline_mode = #tpu.pipeline_mode<synchronous>, transform_indices = @transform_5, window_bounds = array<i64: 32, 1>}, {pipeline_mode = #tpu.pipeline_mode<synchronous>, transform_indices = @transform_6, window_bounds = array<i64: 1, 1>}, {transform_indices = @transform_7, window_bounds = array<i64: 1, 128>}]} {
    %c0 = arith.constant 0 : index
    %c0_0 = arith.constant 0 : index
    %0 = vector.load %arg1[%c0, %c0_0] : memref<2x128xf32, #tpu.memory_space<vmem>>, vector<2x128xf32>
    %c0_1 = arith.constant 0 : index
    %c0_2 = arith.constant 0 : index
    %1 = vector.load %arg2[%c0_1, %c0_2] : memref<32x2xf32, #tpu.memory_space<vmem>>, vector<32x2xf32>
    %2 = vector.extract_strided_slice %1 {offsets = [0, 0], sizes = [32, 1], strides = [1, 1]} : vector<32x2xf32> to vector<32x1xf32>
    %3 = vector.extract_strided_slice %0 {offsets = [0, 0], sizes = [1, 128], strides = [1, 1]} : vector<2x128xf32> to vector<1x128xf32>
    %4 = vector.broadcast %2 : vector<32x1xf32> to vector<32x128xf32>
    %5 = vector.broadcast %3 : vector<1x128xf32> to vector<32x128xf32>
    %6 = arith.mulf %4, %5 : vector<32x128xf32>
    %7 = vector.extract_strided_slice %1 {offsets = [0, 1], sizes = [32, 1], strides = [1, 1]} : vector<32x2xf32> to vector<32x1xf32>
    %8 = vector.extract_strided_slice %0 {offsets = [1, 0], sizes = [1, 128], strides = [1, 1]} : vector<2x128xf32> to vector<1x128xf32>
    %9 = vector.broadcast %7 : vector<32x1xf32> to vector<32x128xf32>
    %10 = vector.broadcast %8 : vector<1x128xf32> to vector<32x128xf32>
    %11 = arith.mulf %9, %10 : vector<32x128xf32>
    %12 = arith.addf %6, %11 : vector<32x128xf32>
    %c0_3 = arith.constant 0 : index
    %c0_4 = arith.constant 0 : index
    %13 = vector.load %arg3[%c0_3, %c0_4] : memref<32x1xf32, #tpu.memory_space<vmem>>, vector<32x1xf32>
    %14 = vector.broadcast %13 : vector<32x1xf32> to vector<32x128xf32>
    %15 = arith.addf %12, %14 : vector<32x128xf32>
    %16 = math.tanh %15 : vector<32x128xf32>
    %c0_5 = arith.constant 0 : index
    %c0_6 = arith.constant 0 : index
    %17 = vector.load %arg4[%c0_5, %c0_6] : memref<32x32xf32, #tpu.memory_space<vmem>>, vector<32x32xf32>
    %cst = arith.constant dense<0.000000e+00> : vector<32x128xf32>
    %18 = tpu.matmul %17, %16, %cst {dimension_numbers = #tpu.dot_dimension_numbers<[1], [0], [0], [1], [0, 0, 1, 1], [], []>} : vector<32x32xf32>, vector<32x128xf32>, vector<32x128xf32> -> vector<32x128xf32>
    %c0_7 = arith.constant 0 : index
    %c0_8 = arith.constant 0 : index
    %19 = vector.load %arg5[%c0_7, %c0_8] : memref<32x1xf32, #tpu.memory_space<vmem>>, vector<32x1xf32>
    %20 = vector.broadcast %19 : vector<32x1xf32> to vector<32x128xf32>
    %21 = arith.addf %18, %20 : vector<32x128xf32>
    %22 = math.tanh %21 : vector<32x128xf32>
    %c0_9 = arith.constant 0 : index
    %c0_10 = arith.constant 0 : index
    %23 = vector.load %arg6[%c0_9, %c0_10] : memref<32x1xf32, #tpu.memory_space<vmem>>, vector<32x1xf32>
    %24 = vector.broadcast %23 : vector<32x1xf32> to vector<32x128xf32>
    %25 = arith.mulf %24, %22 : vector<32x128xf32>
    %cst_11 = arith.constant dense<0.000000e+00> : vector<128xf32>
    %26 = vector.multi_reduction <add>, %25, %cst_11 [0] : vector<32x128xf32> to vector<128xf32>
    %27 = vector.shape_cast %26 : vector<128xf32> to vector<1x128xf32>
    %c0_12 = arith.constant 0 : index
    %c0_13 = arith.constant 0 : index
    %28 = vector.load %arg7[%c0_12, %c0_13] : memref<1x1xf32, #tpu.memory_space<vmem>>, vector<1x1xf32>
    %29 = vector.broadcast %28 : vector<1x1xf32> to vector<1x128xf32>
    %30 = arith.addf %27, %29 : vector<1x128xf32>
    %cst_14 = arith.constant 5.000000e-01 : f32
    %31 = vector.broadcast %cst_14 : f32 to vector<1x128xf32>
    %32 = arith.mulf %31, %30 : vector<1x128xf32>
    %33 = math.tanh %32 : vector<1x128xf32>
    %cst_15 = arith.constant 5.000000e-01 : f32
    %34 = vector.broadcast %cst_15 : f32 to vector<1x128xf32>
    %35 = arith.mulf %34, %33 : vector<1x128xf32>
    %cst_16 = arith.constant 5.000000e-01 : f32
    %36 = vector.broadcast %cst_16 : f32 to vector<1x128xf32>
    %37 = arith.addf %35, %36 : vector<1x128xf32>
    %c0_17 = arith.constant 0 : index
    %c0_18 = arith.constant 0 : index
    %38 = vector.load %arg8[%c0_17, %c0_18] : memref<1x128xf32, #tpu.memory_space<vmem>>, vector<1x128xf32>
    tpu.vector_store %arg8[%c0_17, %c0_18], %37 {strides = array<i32>} : memref<1x128xf32, #tpu.memory_space<vmem>>, vector<1x128xf32>,
    return
  }
  func.func @transform_0(%arg0: i32) -> (i32, i32) {
    %c0_i32 = arith.constant 0 : i32
    %c0_i32_0 = arith.constant 0 : i32
    return %c0_i32, %arg0 : i32, i32
  }
  func.func @transform_1(%arg0: i32) -> (i32, i32) {
    %c0_i32 = arith.constant 0 : i32
    %c0_i32_0 = arith.constant 0 : i32
    %c0_i32_1 = arith.constant 0 : i32
    return %c0_i32, %c0_i32_0 : i32, i32
  }
  func.func @transform_2(%arg0: i32) -> (i32, i32) {
    %c0_i32 = arith.constant 0 : i32
    %c0_i32_0 = arith.constant 0 : i32
    %c0_i32_1 = arith.constant 0 : i32
    return %c0_i32, %c0_i32_0 : i32, i32
  }
  func.func @transform_3(%arg0: i32) -> (i32, i32) {
    %c0_i32 = arith.constant 0 : i32
    %c0_i32_0 = arith.constant 0 : i32
    %c0_i32_1 = arith.constant 0 : i32
    return %c0_i32, %c0_i32_0 : i32, i32
  }
  func.func @transform_4(%arg0: i32) -> (i32, i32) {
    %c0_i32 = arith.constant 0 : i32
    %c0_i32_0 = arith.constant 0 : i32
    %c0_i32_1 = arith.constant 0 : i32
    return %c0_i32, %c0_i32_0 : i32, i32
  }
  func.func @transform_5(%arg0: i32) -> (i32, i32) {
    %c0_i32 = arith.constant 0 : i32
    %c0_i32_0 = arith.constant 0 : i32
    %c0_i32_1 = arith.constant 0 : i32
    return %c0_i32, %c0_i32_0 : i32, i32
  }
  func.func @transform_6(%arg0: i32) -> (i32, i32) {
    %c0_i32 = arith.constant 0 : i32
    %c0_i32_0 = arith.constant 0 : i32
    %c0_i32_1 = arith.constant 0 : i32
    return %c0_i32, %c0_i32_0 : i32, i32
  }
  func.func @transform_7(%arg0: i32) -> (i32, i32) {
    %c0_i32 = arith.constant 0 : i32
    %c0_i32_0 = arith.constant 0 : i32
    return %c0_i32, %arg0 : i32, i32
  }
}

</mosaic_0001>

<llo_original>
// kernel: tpu_custom_call.1
$region0: #{tpu_custom_call.1}
  #allocation0 [shape = 'u32[]', space=smem, size = 0x4, offset = 0x4, fixed_abs, tag = 'smem constant byte address 0x4 - core index']
  #allocation1 [shape = 'u32[144,128]{1,0:T(1,128)}', space=vmem, size = 0x12000, scoped, tag = 'internal scratch']
  #allocation2 [shape = 'f32[1,1]{1,0:T(1,128)S(1)}', space=vmem, size = 0x200, scoped, tag = 'scoped memory for tpu_custom_call.1']
  %s0 = inlined_call_operand.vmem [shape: f32[2,256], index: 0, kind: input, shape index: {}]
  %s1 = inlined_call_operand.vmem [shape: f32[32,2], index: 1, kind: input, shape index: {}]
  %s2 = inlined_call_operand.vmem [shape: f32[32,1], index: 2, kind: input, shape index: {}]
  %s3 = inlined_call_operand.vmem [shape: f32[32,32], index: 3, kind: input, shape index: {}]
  %s4 = inlined_call_operand.vmem [shape: f32[32,1], index: 4, kind: input, shape index: {}]
  %s5 = inlined_call_operand.vmem [shape: f32[32,1], index: 5, kind: input, shape index: {}]
  %s6 = inlined_call_operand.<no memory space> [shape: f32[1,1], index: 6, kind: input, shape index: {}]
  %s7 = inlined_call_operand.hbm [shape: f32[1,256], index: 7, kind: output, shape index: {}]
  %s8 = sld [smem:[#allocation0]]
  $region61: #{tpu_custom_call.1} parent=0
    _
  %s10 = ssub.s32 1, %s8
  %s11 = scalar_select 0, %s10, %s8
  %v12 = vstv %s6
  %13 = vst [vmem:[#allocation2] sm:$0x1] %v12
  $region1: #{tpu_custom_call.1} parent=0
    #allocation3 [shape = 'u8[1024]{0}', space=vmem, size = 0x400, scoped, tag = 'output window, operand 0']
    #allocation4 [shape = 's32[2]{0}', space=sflag, size = 0x8, scoped, tag = 'scoped memory for tpu_custom_call.1']
    %14 = vsyncpa [#allocation4], 0
    %s15 = scalar_lea.sflag [#allocation4], 1
    %16 = vsyncpa %s15, 0
    loop: start=0, step=1, limit=4
    $region2: #{tpu_custom_call.1} parent=1 // loop_pre_header
      _
    $region3: #{tpu_custom_call.1} parent=1 // loop_header
      %s18 = sphi 0, %s22
      %p19 = scmp.ge.s32.totalorder %s18, 4
      %s28 = sphi 0, %s30
      %s31 = sphi 0, %s28
      %s32 = sphi 0, %s31
      %s48 = sphi 0, %s32
      %s52 = sphi 0, %s52
      %s54 = sphi 0, %s52
      %s55 = sphi 0, %s54
      %s69 = sphi 0, %s55
      %s73 = sphi 0, %s73
      %s75 = sphi 0, %s73
      %s76 = sphi 0, %s75
      %s90 = sphi 0, %s76
      %s94 = sphi 0, %s94
      %s96 = sphi 0, %s94
      %s97 = sphi 0, %s96
      %s111 = sphi 0, %s97
      %s115 = sphi 0, %s115
      %s117 = sphi 0, %s115
      %s118 = sphi 0, %s117
      %s132 = sphi 0, %s118
      %s136 = sphi 0, %s136
      %s138 = sphi 0, %s136
      %s139 = sphi 0, %s138
      %s153 = sphi 0, %s139
      %s157 = sphi 0, %s157
      %s159 = sphi 0, %s157
      %s160 = sphi 0, %s159
      %s174 = sphi 0, %s160
      %s180 = sphi 0, %s182
      %s183 = sphi 0, %s180
      %s184 = sphi 0, %s183
      %s200 = sphi 0, %s184
    $region4: #{tpu_custom_call.1} parent=1 // loop_header_branch
      %21 = sbr.rel (%p19) target = $region8
    $region5: #{tpu_custom_call.1} parent=1 // loop_body
      %s23 = ssub.s32 %s18, 1
      %s24 = ssub.s32 %s18, 2
      %s25 = sadd.s32 %s18, 1
      %s26 = ssub.s32 %s18, %s25
      %p27 = scmp.eq.s32.totalorder %s26, 0
      %s29 = sadd.s32 %s28, 1
      %s30 = scalar_select %p27, %s28, %s29
      %p33 = pneg %p27
      %p34 = scmp.eq.s32.totalorder %s18, 1
      %p35 = por %p33, %p34
      %p36 = scmp.ne.s32.totalorder %s28, %s31
      %p37 = scmp.eq.s32.totalorder %s18, 0
      %p38 = por %p36, %p37
      %p39 = scmp.ne.s32.totalorder %s28, %s31
      %p40 = scmp.eq.s32.totalorder %s23, 1
      %p41 = por %p39, %p40
      %p42 = scmp.ne.s32.totalorder %s31, %s32
      %p43 = scmp.eq.s32.totalorder %s23, 0
      %p44 = por %p42, %p43
      %p45 = scmp.ne.s32.totalorder %s31, %s32
      %p46 = scmp.eq.s32.totalorder %s24, 1
      %p47 = por %p45, %p46
      %p49 = scmp.ne.s32.totalorder %s32, %s48
      %p50 = scmp.eq.s32.totalorder %s24, 0
      %p51 = por %p49, %p50
      %s53 = sadd.s32 %s52, 1
      %p56 = scmp.eq.s32.totalorder %s18, 1
      %p57 = scmp.ne.s32.totalorder %s52, %s54
      %p58 = scmp.eq.s32.totalorder %s18, 0
      %p59 = por %p57, %p58
      %p60 = scmp.ne.s32.totalorder %s52, %s54
      %p61 = scmp.eq.s32.totalorder %s23, 1
      %p62 = por %p60, %p61
      %p63 = scmp.ne.s32.totalorder %s54, %s55
      %p64 = scmp.eq.s32.totalorder %s23, 0
      %p65 = por %p63, %p64
      %p66 = scmp.ne.s32.totalorder %s54, %s55
      %p67 = scmp.eq.s32.totalorder %s24, 1
      %p68 = por %p66, %p67
      %p70 = scmp.ne.s32.totalorder %s55, %s69
      %p71 = scmp.eq.s32.totalorder %s24, 0
      %p72 = por %p70, %p71
      %s74 = sadd.s32 %s73, 1
      %p77 = scmp.eq.s32.totalorder %s18, 1
      %p78 = scmp.ne.s32.totalorder %s73, %s75
      %p79 = scmp.eq.s32.totalorder %s18, 0
      %p80 = por %p78, %p79
      %p81 = scmp.ne.s32.totalorder %s73, %s75
      %p82 = scmp.eq.s32.totalorder %s23, 1
      %p83 = por %p81, %p82
      %p84 = scmp.ne.s32.totalorder %s75, %s76
      %p85 = scmp.eq.s32.totalorder %s23, 0
      %p86 = por %p84, %p85
      %p87 = scmp.ne.s32.totalorder %s75, %s76
      %p88 = scmp.eq.s32.totalorder %s24, 1
      %p89 = por %p87, %p88
      %p91 = scmp.ne.s32.totalorder %s76, %s90
      %p92 = scmp.eq.s32.totalorder %s24, 0
      %p93 = por %p91, %p92
      %s95 = sadd.s32 %s94, 1
      %p98 = scmp.eq.s32.totalorder %s18, 1
      %p99 = scmp.ne.s32.totalorder %s94, %s96
      %p100 = scmp.eq.s32.totalorder %s18, 0
      %p101 = por %p99, %p100
      %p102 = scmp.ne.s32.totalorder %s94, %s96
      %p103 = scmp.eq.s32.totalorder %s23, 1
      %p104 = por %p102, %p103
      %p105 = scmp.ne.s32.totalorder %s96, %s97
      %p106 = scmp.eq.s32.totalorder %s23, 0
      %p107 = por %p105, %p106
      %p108 = scmp.ne.s32.totalorder %s96, %s97
      %p109 = scmp.eq.s32.totalorder %s24, 1
      %p110 = por %p108, %p109
      %p112 = scmp.ne.s32.totalorder %s97, %s111
      %p113 = scmp.eq.s32.totalorder %s24, 0
      %p114 = por %p112, %p113
      %s116 = sadd.s32 %s115, 1
      %p119 = scmp.eq.s32.totalorder %s18, 1
      %p120 = scmp.ne.s32.totalorder %s115, %s117
      %p121 = scmp.eq.s32.totalorder %s18, 0
      %p122 = por %p120, %p121
      %p123 = scmp.ne.s32.totalorder %s115, %s117
      %p124 = scmp.eq.s32.totalorder %s23, 1
      %p125 = por %p123, %p124
      %p126 = scmp.ne.s32.totalorder %s117, %s118
      %p127 = scmp.eq.s32.totalorder %s23, 0
      %p128 = por %p126, %p127
      %p129 = scmp.ne.s32.totalorder %s117, %s118
      %p130 = scmp.eq.s32.totalorder %s24, 1
      %p131 = por %p129, %p130
      %p133 = scmp.ne.s32.totalorder %s118, %s132
      %p134 = scmp.eq.s32.totalorder %s24, 0
      %p135 = por %p133, %p134
      %s137 = sadd.s32 %s136, 1
      %p140 = scmp.eq.s32.totalorder %s18, 1
      %p141 = scmp.ne.s32.totalorder %s136, %s138
      %p142 = scmp.eq.s32.totalorder %s18, 0
      %p143 = por %p141, %p142
      %p144 = scmp.ne.s32.totalorder %s136, %s138
      %p145 = scmp.eq.s32.totalorder %s23, 1
      %p146 = por %p144, %p145
      %p147 = scmp.ne.s32.totalorder %s138, %s139
      %p148 = scmp.eq.s32.totalorder %s23, 0
      %p149 = por %p147, %p148
      %p150 = scmp.ne.s32.totalorder %s138, %s139
      %p151 = scmp.eq.s32.totalorder %s24, 1
      %p152 = por %p150, %p151
      %p154 = scmp.ne.s32.totalorder %s139, %s153
      %p155 = scmp.eq.s32.totalorder %s24, 0
      %p156 = por %p154, %p155
      %s158 = sadd.s32 %s157, 1
      %p161 = scmp.eq.s32.totalorder %s18, 1
      %p162 = scmp.ne.s32.totalorder %s157, %s159
      %p163 = scmp.eq.s32.totalorder %s18, 0
      %p164 = por %p162, %p163
      %p165 = scmp.ne.s32.totalorder %s157, %s159
      %p166 = scmp.eq.s32.totalorder %s23, 1
      %p167 = por %p165, %p166
      %p168 = scmp.ne.s32.totalorder %s159, %s160
      %p169 = scmp.eq.s32.totalorder %s23, 0
      %p170 = por %p168, %p169
      %p171 = scmp.ne.s32.totalorder %s159, %s160
      %p172 = scmp.eq.s32.totalorder %s24, 1
      %p173 = por %p171, %p172
      %p175 = scmp.ne.s32.totalorder %s160, %s174
      %p176 = scmp.eq.s32.totalorder %s24, 0
      %p177 = por %p175, %p176
      %s178 = ssub.s32 %s18, %s25
      %p179 = scmp.eq.s32.totalorder %s178, 0
      %s181 = sadd.s32 %s180, 1
      %s182 = scalar_select %p179, %s180, %s181
      %p185 = pneg %p179
      %p186 = scmp.eq.s32.totalorder %s18, 1
      %p187 = por %p185, %p186
      %p188 = scmp.ne.s32.totalorder %s180, %s183
      %p189 = scmp.eq.s32.totalorder %s18, 0
      %p190 = por %p188, %p189
      %p191 = scmp.ne.s32.totalorder %s180, %s183
      %p192 = scmp.eq.s32.totalorder %s23, 1
      %p193 = por %p191, %p192
      %p194 = scmp.ne.s32.totalorder %s183, %s184
      %p195 = scmp.eq.s32.totalorder %s23, 0
      %p196 = por %p194, %p195
      %p197 = scmp.ne.s32.totalorder %s183, %s184
      %p198 = scmp.eq.s32.totalorder %s24, 1
      %p199 = por %p197, %p198
      %p201 = scmp.ne.s32.totalorder %s184, %s200
      %p202 = scmp.eq.s32.totalorder %s24, 0
      %p203 = por %p201, %p202
      %p204 = scmp.le.s32.totalorder 1, %s18
      %p205 = scmp.lt.s32.totalorder %s18, 3
      %p206 = pnand %p204, %p205
      %p207 = pneg %p206
      // Predicated region
      $region9: #{tpu_custom_call.1} parent=5 // pred_check
        _
      $region10: #{tpu_custom_call.1} parent=5 // pred_check_branch
        %209 = sbr.rel (%p206) target = $region12
      $region11: #{tpu_custom_call.1} parent=5 // pred_region
        %s210 = ssub.s32 %s18, 1
        // Predicated region
        $region13: #{tpu_custom_call.1} parent=11 // pred_check
          %p211 = pneg %p65
        $region14: #{tpu_custom_call.1} parent=11 // pred_check_branch
          %213 = sbr.rel (%p211) target = $region16
        $region15: #{tpu_custom_call.1} parent=11 // pred_region
          _
        $region16: #{tpu_custom_call.1} parent=11 // pred_fallthru
          _
        // Predicated region
        $region17: #{tpu_custom_call.1} parent=11 // pred_check
          %p214 = pneg %p86
        $region18: #{tpu_custom_call.1} parent=11 // pred_check_branch
          %216 = sbr.rel (%p214) target = $region20
        $region19: #{tpu_custom_call.1} parent=11 // pred_region
          _
        $region20: #{tpu_custom_call.1} parent=11 // pred_fallthru
          _
        // Predicated region
        $region21: #{tpu_custom_call.1} parent=11 // pred_check
          %p217 = pneg %p107
        $region22: #{tpu_custom_call.1} parent=11 // pred_check_branch
          %219 = sbr.rel (%p217) target = $region24
        $region23: #{tpu_custom_call.1} parent=11 // pred_region
          _
        $region24: #{tpu_custom_call.1} parent=11 // pred_fallthru
          _
        // Predicated region
        $region25: #{tpu_custom_call.1} parent=11 // pred_check
          %p220 = pneg %p128
        $region26: #{tpu_custom_call.1} parent=11 // pred_check_branch
          %222 = sbr.rel (%p220) target = $region28
        $region27: #{tpu_custom_call.1} parent=11 // pred_region
          _
        $region28: #{tpu_custom_call.1} parent=11 // pred_fallthru
          _
        // Predicated region
        $region29: #{tpu_custom_call.1} parent=11 // pred_check
          %p223 = pneg %p149
        $region30: #{tpu_custom_call.1} parent=11 // pred_check_branch
          %225 = sbr.rel (%p223) target = $region32
        $region31: #{tpu_custom_call.1} parent=11 // pred_region
          _
        $region32: #{tpu_custom_call.1} parent=11 // pred_fallthru
          _
        // Predicated region
        $region33: #{tpu_custom_call.1} parent=11 // pred_check
          %p226 = pneg %p170
        $region34: #{tpu_custom_call.1} parent=11 // pred_check_branch
          %228 = sbr.rel (%p226) target = $region36
        $region35: #{tpu_custom_call.1} parent=11 // pred_region
          _
        $region36: #{tpu_custom_call.1} parent=11 // pred_fallthru
          _
      $region12: #{tpu_custom_call.1} parent=5 // pred_fallthru
        _
      %p229 = scmp.lt.s32.totalorder %s18, 2
      // Predicated region
      $region37: #{tpu_custom_call.1} parent=5 // pred_check
        %p230 = pneg %p229
      $region38: #{tpu_custom_call.1} parent=5 // pred_check_branch
        %232 = sbr.rel (%p230) target = $region40
      $region39: #{tpu_custom_call.1} parent=5 // pred_region
        // Predicated region
        $region41: #{tpu_custom_call.1} parent=39 // pred_check
          %p233 = pneg %p38
        $region42: #{tpu_custom_call.1} parent=39 // pred_check_branch
          %235 = sbr.rel (%p233) target = $region44
        $region43: #{tpu_custom_call.1} parent=39 // pred_region
          %p236 = scmp.lt.s32.totalorder %s18, 1
          %s237 = scalar_select %p236, %s18, 1
          %s238 = smul.addr %s237, 2
          %s239 = scalar_lea.vmem %s0, %s238
        $region44: #{tpu_custom_call.1} parent=39 // pred_fallthru
          _
      $region40: #{tpu_custom_call.1} parent=5 // pred_fallthru
        _
      %p240 = scmp.le.s32.totalorder 1, %s18
      %p241 = scmp.lt.s32.totalorder %s18, 3
      %p242 = pnand %p240, %p241
      %p243 = pneg %p242
      // Predicated region
      $region45: #{tpu_custom_call.1} parent=5 // pred_check
        _
      $region46: #{tpu_custom_call.1} parent=5 // pred_check_branch
        %245 = sbr.rel (%p242) target = $region48
      $region47: #{tpu_custom_call.1} parent=5 // pred_region
        %s246 = ssub.s32 %s18, 1
        %p247 = scmp.lt.s32.totalorder %s23, 1
        %s248 = scalar_select %p247, %s23, 1
        %s249 = smul.addr %s248, 2
        %s250 = scalar_lea.vmem %s0, %s249
        %p251 = pneg %p44
        %p252 = pneg %p41
        %p253 = pneg %p65
        %p254 = pneg %p62
        %p255 = pneg %p86
        %p256 = pneg %p83
        %p257 = pneg %p107
        %p258 = pneg %p104
        %p259 = pneg %p128
        %p260 = pneg %p125
        %p261 = pneg %p149
        %p262 = pneg %p146
        %p263 = pneg %p170
        %p264 = pneg %p167
        %p265 = pneg %p196
        %p266 = pneg %p193
        %s267 = sand.u32 %s183, 1
        %s268 = scalar_lea.sflag [#allocation4], %s267
        %s269 = sand.u32 %s183, 1
        %s270 = scalar_lea.vmem [#allocation3], %s269
        %p271 = scmp.lt.s32.totalorder %s23, 1
        %s272 = scalar_select %p271, %s23, 1
        %s273 = smul.addr %s272, 2
        %s274 = scalar_lea.vmem %s0, %s273
        %v275 = vld [vmem:[%s274] sm:$0x3]
        %v276 = vld [vmem:[%s1] sm:$0xff]
        %v277 = vld [vmem:[%s1 + $0x8] sm:$0xff]
        %v278 = vld [vmem:[%s1 + $0x10] sm:$0xff]
        %v279 = vld [vmem:[%s1 + $0x18] sm:$0xff]
        %281 = vset.pattern.permute.xlu0 0
        %282 = vperm.xlu0 %281, %v276
        %v283 = vpop.permute.xlu0 %282
        %286 = vset.pattern.permute.xlu0 0
        %287 = vperm.xlu0 %286, %v277
        %v288 = vpop.permute.xlu0 %287
        %291 = vset.pattern.permute.xlu0 0
        %292 = vperm.xlu0 %291, %v278
        %v293 = vpop.permute.xlu0 %292
        %296 = vset.pattern.permute.xlu0 0
        %297 = vperm.xlu0 %296, %v279
        %v298 = vpop.permute.xlu0 %297
        %v300 = vlaneseq
        %v301 = vshrl.u32 %v300, 7
        %v302 = vsub.s32 0, %v301
        %v303 = vrot.slane %v275, %v302
        %v304 = vmul.f32 %v283, %v303
        %v305 = vmul.f32 %v288, %v303
        %v306 = vmul.f32 %v293, %v303
        %v307 = vmul.f32 %v298, %v303
        %308 = vset.pattern.permute.xlu0 1
        %309 = vperm.xlu0 %308, %v276
        %v310 = vpop.permute.xlu0 %309
        %312 = vset.pattern.permute.xlu0 1
        %313 = vperm.xlu0 %312, %v277
        %v314 = vpop.permute.xlu0 %313
        %316 = vset.pattern.permute.xlu0 1
        %317 = vperm.xlu0 %316, %v278
        %v318 = vpop.permute.xlu0 %317
        %320 = vset.pattern.permute.xlu0 1
        %321 = vperm.xlu0 %320, %v279
        %v322 = vpop.permute.xlu0 %321
        %v324 = vlaneseq
        %v325 = vshrl.u32 %v324, 7
        %v326 = vsub.s32 1, %v325
        %v327 = vrot.slane %v275, %v326
        %v328 = vmul.f32 %v310, %v327
        %v329 = vmul.f32 %v314, %v327
        %v330 = vmul.f32 %v318, %v327
        %v331 = vmul.f32 %v322, %v327
        %v332 = vadd.f32 %v304, %v328
        %v333 = vadd.f32 %v305, %v329
        %v334 = vadd.f32 %v306, %v330
        %v335 = vadd.f32 %v307, %v331
        %v336 = vld [vmem:[%s2] sm:$0xff]
        %v337 = vld [vmem:[%s2 + $0x8] sm:$0xff]
        %v338 = vld [vmem:[%s2 + $0x10] sm:$0xff]
        %v339 = vld [vmem:[%s2 + $0x18] sm:$0xff]
        %341 = vset.pattern.permute.xlu0 0
        %342 = vperm.xlu0 %341, %v336
        %v343 = vpop.permute.xlu0 %342
        %346 = vset.pattern.permute.xlu0 0
        %347 = vperm.xlu0 %346, %v337
        %v348 = vpop.permute.xlu0 %347
        %351 = vset.pattern.permute.xlu0 0
        %352 = vperm.xlu0 %351, %v338
        %v353 = vpop.permute.xlu0 %352
        %356 = vset.pattern.permute.xlu0 0
        %357 = vperm.xlu0 %356, %v339
        %v358 = vpop.permute.xlu0 %357
        %v360 = vadd.f32 %v332, %v343
        %v361 = vadd.f32 %v333, %v348
        %v362 = vadd.f32 %v334, %v353
        %v363 = vadd.f32 %v335, %v358
        %v364 = vtanh.pop %v360
        %v365 = vtanh.pop %v361
        %v366 = vtanh.pop %v362
        %v367 = vtanh.pop %v363
        %v368 = vld [vmem:[%s3] sm:$0xff]
        %v369 = vld [vmem:[%s3 + $0x8] sm:$0xff]
        %v370 = vld [vmem:[%s3 + $0x10] sm:$0xff]
        %v371 = vld [vmem:[%s3 + $0x18] sm:$0xff]
        %v372 = vld [vmem:[%s4] sm:$0xff]
        %v373 = vld [vmem:[%s4 + $0x8] sm:$0xff]
        %v374 = vld [vmem:[%s4 + $0x10] sm:$0xff]
        %v375 = vld [vmem:[%s4 + $0x18] sm:$0xff]
        %377 = vset.pattern.permute.xlu0 0
        %378 = vperm.xlu0 %377, %v372
        %v379 = vpop.permute.xlu0 %378
        %382 = vset.pattern.permute.xlu0 0
        %383 = vperm.xlu0 %382, %v373
        %v384 = vpop.permute.xlu0 %383
        %387 = vset.pattern.permute.xlu0 0
        %388 = vperm.xlu0 %387, %v374
        %v389 = vpop.permute.xlu0 %388
        %392 = vset.pattern.permute.xlu0 0
        %393 = vperm.xlu0 %392, %v375
        %v394 = vpop.permute.xlu0 %393
        %vm396 = vcmask 261120
        %v398 = vsel %vm396, %v368, 0
        %v401 = vsel %vm396, %v369, 0
        %v404 = vsel %vm396, %v370, 0
        %v407 = vsel %vm396, %v371, 0
        %409 = vmatprep.subr.mxu0 0.0
        %410 = vmatpush1.msra.mxu0 %v364
        %411 = vmatprep.subr.mxu0 0.0
        %412 = vmatpush1.msra.mxu0 %v365
        %413 = vmatprep.subr.mxu0 0.0
        %414 = vmatpush1.msra.mxu0 %v366
        %415 = vmatprep.subr.mxu0 0.0
        %416 = vmatpush1.msra.mxu0 %v367
        %417 = vmatprep.subr.mxu0 0.0
        %418 = vmatpush1.msra.mxu0 0.0
        %419 = vmatprep.subr.mxu0 0.0
        %420 = vmatpush1.msra.mxu0 0.0
        %421 = vmatprep.subr.mxu0 0.0
        %422 = vmatpush1.msra.mxu0 0.0
        %423 = vmatprep.subr.mxu0 0.0
        %424 = vmatpush1.msra.mxu0 0.0
        %425 = vmatprep.subr.mxu0 0.0
        %426 = vmatpush1.msra.mxu0 0.0
        %427 = vmatprep.subr.mxu0 0.0
        %428 = vmatpush1.msra.mxu0 0.0
        %429 = vmatprep.subr.mxu0 0.0
        %430 = vmatpush1.msra.mxu0 0.0
        %431 = vmatprep.subr.mxu0 0.0
        %432 = vmatpush1.msra.mxu0 0.0
        %433 = vmatprep.subr.mxu0 0.0
        %434 = vmatpush1.msra.mxu0 0.0
        %435 = vmatprep.subr.mxu0 0.0
        %436 = vmatpush1.msra.mxu0 0.0
        %437 = vmatprep.subr.mxu0 0.0
        %438 = vmatpush1.msra.mxu0 0.0
        %439 = vmatprep.subr.mxu0 0.0
        %440 = vmatpush1.msra.mxu0 0.0
        %441 = vmatprep.subr.mxu0 0.0
        %442 = vmatpush1.msra.mxu0 0.0
        %443 = vmatprep.subr.mxu0 0.0
        %444 = vmatpush1.msra.mxu0 0.0
        %445 = vmatprep.subr.mxu0 0.0
        %446 = vmatpush1.msra.mxu0 0.0
        %447 = vmatprep.subr.mxu0 0.0
        %448 = vmatpush1.msra.mxu0 0.0
        %449 = vmatprep.subr.mxu0 0.0
        %450 = vmatpush1.msra.mxu0 0.0
        %451 = vmatprep.subr.mxu0 0.0
        %452 = vmatpush1.msra.mxu0 0.0
        %453 = vmatprep.subr.mxu0 0.0
        %454 = vmatpush1.msra.mxu0 0.0
        %455 = vmatprep.subr.mxu0 0.0
        %456 = vmatpush1.msra.mxu0 0.0
        %457 = vmatprep.subr.mxu0 0.0
        %458 = vmatpush1.msra.mxu0 0.0
        %459 = vmatprep.subr.mxu0 0.0
        %460 = vmatpush1.msra.mxu0 0.0
        %461 = vmatprep.subr.mxu0 0.0
        %462 = vmatpush1.msra.mxu0 0.0
        %463 = vmatprep.subr.mxu0 0.0
        %464 = vmatpush1.msra.mxu0 0.0
        %465 = vmatprep.subr.mxu0 0.0
        %466 = vmatpush1.msra.mxu0 0.0
        %467 = vmatprep.subr.mxu0 0.0
        %468 = vmatpush1.msra.mxu0 0.0
        %469 = vmatprep.subr.mxu0 0.0
        %470 = vmatpush1.msra.mxu0 0.0
        %471 = vmatprep.subr.mxu0 0.0
        %472 = vmatpush1.msra.mxu0 0.0
        %473 = vmatprep.mubr.f32.mxu0 0.0
        %474 = vmatmul.mubr.f32.gmra.mrb[0].mxu0 %v398
        %v475 = vpop.f32.mrb[0].mxu0
        %v476 = vadd.f32 %v379, %v475
        %v477 = vpop.f32.mrb[0].mxu0
        %478 = vmatprep.mubr.f32.mxu0 0.0
        %479 = vmatmul.mubr.f32.gmra.mrb[0].mxu0 %v401
        %v480 = vpop.f32.mrb[0].mxu0
        %v481 = vadd.f32 %v384, %v480
        %v482 = vpop.f32.mrb[0].mxu0
        %483 = vmatprep.mubr.f32.mxu0 0.0
        %484 = vmatmul.mubr.f32.gmra.mrb[0].mxu0 %v404
        %v485 = vpop.f32.mrb[0].mxu0
        %v486 = vadd.f32 %v389, %v485
        %v487 = vpop.f32.mrb[0].mxu0
        %488 = vmatprep.mubr.f32.mxu0 0.0
        %489 = vmatmul.mubr.f32.gmra.mrb[0].mxu0 %v407
        %v490 = vpop.f32.mrb[0].mxu0
        %v491 = vadd.f32 %v394, %v490
        %v492 = vpop.f32.mrb[0].mxu0
        %493 = vdwg.mxu0
        %v494 = vtanh.pop %v476
        %v495 = vtanh.pop %v481
        %v496 = vtanh.pop %v486
        %v497 = vtanh.pop %v491
        %v498 = vld [vmem:[%s5] sm:$0xff]
        %v499 = vld [vmem:[%s5 + $0x8] sm:$0xff]
        %v500 = vld [vmem:[%s5 + $0x10] sm:$0xff]
        %v501 = vld [vmem:[%s5 + $0x18] sm:$0xff]
        %503 = vset.pattern.permute.xlu0 0
        %504 = vperm.xlu0 %503, %v498
        %v505 = vpop.permute.xlu0 %504
        %508 = vset.pattern.permute.xlu0 0
        %509 = vperm.xlu0 %508, %v499
        %v510 = vpop.permute.xlu0 %509
        %513 = vset.pattern.permute.xlu0 0
        %514 = vperm.xlu0 %513, %v500
        %v515 = vpop.permute.xlu0 %514
        %518 = vset.pattern.permute.xlu0 0
        %519 = vperm.xlu0 %518, %v501
        %v520 = vpop.permute.xlu0 %519
        %v522 = vmul.f32 %v505, %v494
        %v523 = vmul.f32 %v510, %v495
        %v524 = vmul.f32 %v515, %v496
        %v525 = vmul.f32 %v520, %v497
        %v526 = vadd.f32 %v522, %v523
        %v527 = vadd.f32 %v526, %v524
        %v528 = vadd.f32 %v527, %v525
        %v529 = vrot.slane %v528, 4
        %v530 = vadd.f32 %v528, %v529
        %v531 = vrot.slane %v530, 2
        %v532 = vadd.f32 %v530, %v531
        %v533 = vrot.slane %v532, 1
        %v534 = vadd.f32 %v532, %v533
        %v535 = vld [vmem:[#allocation2] sm:$0x1]
        %537 = vset.pattern.permute.xlu0 0
        %538 = vperm.xlu0 %537, %v535
        %v539 = vpop.permute.xlu0 %538
        %v541 = vlaneseq
        %v542 = vshrl.u32 %v541, 7
        %v543 = vsub.s32 0, %v542
        %v544 = vrot.slane %v539, %v543
        %v545 = vadd.f32 %v534, %v544
        %v546 = vmul.f32 %v545, 0.5
        %v547 = vtanh.pop %v546
        %v548 = vmul.f32 %v547, 0.5
        %v549 = vadd.f32 %v548, 0.5
        %550 = vst [vmem:[%s270] sm:$0x1] %v549
        %s551 = sand.u32 %s183, 1
        %s552 = scalar_lea.sflag [#allocation4], %s551
        %s553 = sand.u32 %s183, 1
        %s554 = scalar_lea.vmem [#allocation3], %s553
        // Predicated region
        $region49: #{tpu_custom_call.1} parent=47 // pred_check
          %p555 = pneg %p193
        $region50: #{tpu_custom_call.1} parent=47 // pred_check_branch
          %557 = sbr.rel (%p555) target = $region52
        $region51: #{tpu_custom_call.1} parent=47 // pred_region
          %s559 = ssub.s32 16, 16
          %560 = vsyncadd %s552, %s559
          %s561 = smul.addr %s23, 16
          %s562 = scalar_lea.hbm %s7, %s561
          %s564 = sshll.u32 %s554, 4
          %s565 = int_to_ptr.vmem [resolvable:$true] %s564
          %567 = dma.vmem_to_hbm [thread:$0]  %s565, 16, %s562, %s552
        $region52: #{tpu_custom_call.1} parent=47 // pred_fallthru
          _
      $region48: #{tpu_custom_call.1} parent=5 // pred_fallthru
        _
      %p568 = scmp.le.s32.totalorder 2, %s18
      // Predicated region
      $region53: #{tpu_custom_call.1} parent=5 // pred_check
        %p569 = pneg %p568
      $region54: #{tpu_custom_call.1} parent=5 // pred_check_branch
        %571 = sbr.rel (%p569) target = $region56
      $region55: #{tpu_custom_call.1} parent=5 // pred_region
        %s572 = ssub.s32 %s18, 2
        // Predicated region
        $region57: #{tpu_custom_call.1} parent=55 // pred_check
          %p573 = pneg %p199
        $region58: #{tpu_custom_call.1} parent=55 // pred_check_branch
          %575 = sbr.rel (%p573) target = $region60
        $region59: #{tpu_custom_call.1} parent=55 // pred_region
          %s576 = sand.u32 %s184, 1
          %s577 = scalar_lea.sflag [#allocation4], %s576
          %s578 = sand.u32 %s184, 1
          %s579 = scalar_lea.vmem [#allocation3], %s578
          %580 = dma.done %s577, 16
        $region60: #{tpu_custom_call.1} parent=55 // pred_fallthru
          _
      $region56: #{tpu_custom_call.1} parent=5 // pred_fallthru
        _
    $region6: #{tpu_custom_call.1} parent=1 // loop_footer
      %s22 = sadd.s32 1, %s18
    $region7: #{tpu_custom_call.1} parent=1 // loop_footer_branch
      %17 = sbr.rel target = $region3
    $region8: #{tpu_custom_call.1} parent=1 // loop_exit
      _
    %581 = vsyncpa [#allocation4], 1
    %s582 = scalar_lea.sflag [#allocation4], 1
    %583 = vsyncpa %s582, 1

</llo_original>
